<compile_context>
chip_gen: v7x
topology: tpu7x:2x2x1
jax: 0.10.0
libtpu: 0.0.40
codegen_flags: <defaults>
</compile_context>

<pallas_src>
import jax
import jax.numpy as jnp
from jax.experimental import pallas as pl
from jax.experimental.pallas import tpu as pltpu


def _round_up(x, m):
    return (x + m - 1) // m * m


def make_pinn_kernel(n_hidden, in_dim, use_bf16, vpu_first):
    """Kernel: first Linear+ReLU, n_hidden x (Linear+ReLU), final Linear.

    Batch-on-lanes layout: activations are (features, tile)."""

    def maybe_bf16(v):
        return v.astype(jnp.bfloat16) if use_bf16 else v

    def kernel(*refs):
        idx = 0
        xT_ref = refs[idx]; idx += 1             # (in_dim, tile)
        w0T_ref = refs[idx]; idx += 1            # (L0, in_dim)
        b0_ref = refs[idx]; idx += 1             # (L0, 1)
        if n_hidden > 0:
            whT_ref = refs[idx]; idx += 1        # (n_hidden, L, L)  stacked W_j^T
            bh_ref = refs[idx]; idx += 1         # (n_hidden, L, 1)
        wLT_ref = refs[idx]; idx += 1            # (out_dim, L)
        bL_ref = refs[idx]; idx += 1             # (out_dim, 1)
        o_ref = refs[idx]                        # (out_dim, tile)

        xT = xT_ref[...]
        w0T = w0T_ref[...]
        b0 = b0_ref[...]

        # ---- First layer: tiny contraction (K = in_dim) ----
        if vpu_first:
            # K is tiny (e.g. 2 coords): a full MXU pass would waste a weight
            # load/drain for a 2/128-wide contraction.  Do rank-1 VPU FMAs.
            h = b0 + w0T[:, 0:1] * xT[0:1, :]
            for k in range(1, in_dim):
                h = h + w0T[:, k:k + 1] * xT[k:k + 1, :]
        else:
            h = jnp.dot(maybe_bf16(w0T), maybe_bf16(xT),
                        preferred_element_type=jnp.float32) + b0
        h = jnp.maximum(h, 0.0)

        # ---- Hidden layers (MXU; result N dim = batch lanes) ----
        for j in range(n_hidden):
            wT = whT_ref[j]                      # (L, L)
            b = bh_ref[j]                        # (L, 1)
            h = jnp.dot(maybe_bf16(wT), maybe_bf16(h),
                        preferred_element_type=jnp.float32) + b
            h = jnp.maximum(h, 0.0)

        # ---- Output layer (no activation) ----
        out = jnp.dot(maybe_bf16(wLT_ref[...]), maybe_bf16(h),
                      preferred_element_type=jnp.float32) + bL_ref[...]
        o_ref[...] = out.astype(o_ref.dtype)

    return kernel


def pinn_forward(x, params, *, tile_m=8192, use_bf16=False):
    """Run the PINN forward pass with a Pallas TPU kernel.

    x:      (N, in_dim) float32 (any N; padded internally)
    params: list of (W, b) with W (fan_in, fan_out), b (fan_out,)
            (identical math to PyTorch's  h @ W_pt.T + b  with W_pt = W.T)
    """
    N, in_dim = x.shape
    assert len(params) >= 2, "PINN has at least first + output Linear"
    assert tile_m >= 128 and tile_m % 128 == 0

    out_dim = params[-1][0].shape[1]
    first_w, first_b = params[0]
    last_w, last_b = params[-1]
    hidden = params[1:-1]
    n_hidden = len(hidden)
    if n_hidden:
        L = hidden[0][0].shape[0]
        assert all(w.shape == (L, L) for w, _ in hidden), \
            "hidden layers must be uniform (L, L) to be stacked"
        assert first_w.shape[1] == L
    max_width = max(int(w.shape[1]) for w, _ in params)
    param_elems = sum(int(w.size) + int(b.size) for w, b in params)

    # --- tile selection ---
    # Lane-dense tiles, as large as possible to amortize per-step overhead and
    # MXU weight-load latency, but (a) keep >= 2 grid steps when the batch
    # allows so the "parallel" axis can shard across v7x's two TensorCores,
    # and (b) stay inside a conservative VMEM budget.
    n_pad128 = _round_up(N, 128)
    tile = max(128, min(tile_m, _round_up(pl.cdiv(n_pad128, 2), 128)))

    def vmem_need(t):
        return (2 * 4 * (in_dim + out_dim) * t      # double-buffered x / out blocks
                + 4 * 4 * max_width * t             # a few live activation slabs
                + 2 * 4 * param_elems)              # resident weights / biases

    VMEM_CAP = 40 * 1024 * 1024                     # safe under v7x 64 MiB physical
    while tile > 128 and vmem_need(tile) > VMEM_CAP:
        tile = max(128, _round_up(tile // 2, 128))

    n_pad = _round_up(N, tile)
    grid = (n_pad // tile,)

    # Batch on lanes: transpose (only in_dim rows, cheap) and pad the batch.
    # TODO(synk): for huge N on v5e, feed x un-transposed and build xT in-kernel
    # to avoid the extra HBM pass of this wrapper-side transpose/pad.
    xT = x.T
    if n_pad != N:
        xT = jnp.pad(xT, ((0, 0), (0, n_pad - N)))

    # Operands: weights pre-transposed to (fan_out, fan_in); hidden layers are
    # stacked into single operands to cut operand / DMA-descriptor count.
    w0T = jnp.asarray(first_w).T                       # (L0, in_dim)
    b0 = jnp.asarray(first_b).reshape(-1, 1)           # (L0, 1)
    wLT = jnp.asarray(last_w).T                        # (out_dim, L)
    bL = jnp.asarray(last_b).reshape(-1, 1)            # (out_dim, 1)

    inputs = [xT, w0T, b0]
    in_specs = [
        pl.BlockSpec((in_dim, tile), lambda i: (0, i)),
        pl.BlockSpec(w0T.shape, lambda i: (0, 0)),
        pl.BlockSpec(b0.shape, lambda i: (0, 0)),
    ]
    if n_hidden:
        whT = jnp.stack([jnp.asarray(w).T for w, _ in hidden])              # (n_hidden, L, L)
        bh = jnp.stack([jnp.asarray(b).reshape(-1, 1) for _, b in hidden])  # (n_hidden, L, 1)
        inputs += [whT, bh]
        in_specs += [
            pl.BlockSpec(whT.shape, lambda i: (0, 0, 0)),
            pl.BlockSpec(bh.shape, lambda i: (0, 0, 0)),
        ]
    inputs += [wLT, bL]
    in_specs += [
        pl.BlockSpec(wLT.shape, lambda i: (0, 0)),
        pl.BlockSpec(bL.shape, lambda i: (0, 0)),
    ]

    vpu_first = in_dim <= 8          # tiny contraction -> VPU, skip an MXU pass
    kernel = make_pinn_kernel(n_hidden, in_dim, use_bf16, vpu_first)

    # Advisory cost estimate for XLA scheduling.
    flops = 2 * n_pad * sum(int(w.shape[0]) * int(w.shape[1]) for w, _ in params)
    bytes_accessed = 4 * (in_dim * n_pad + out_dim * n_pad + param_elems)

    # Explicit VMEM limit: above v5e's 16 MiB scoped default, headroom over the
    # actual need, capped well below v7x's 64 MiB physical VMEM.
    vmem_limit = int(min(max(vmem_need(tile) + (8 << 20), 32 << 20), 48 << 20))

    outT = pl.pallas_call(
        kernel,
        out_shape=jax.ShapeDtypeStruct((out_dim, n_pad), x.dtype),
        grid_spec=pl.GridSpec(
            grid=grid,
            in_specs=in_specs,
            out_specs=pl.BlockSpec((out_dim, tile), lambda i: (0, i)),
        ),
        compiler_params=pltpu.CompilerParams(
            dimension_semantics=("parallel",),
            vmem_limit_bytes=vmem_limit,
        ),
        cost_estimate=pl.CostEstimate(
            flops=flops, transcendentals=0, bytes_accessed=bytes_accessed),
    )(*inputs)

    # Back to the PyTorch (N, out_dim) layout, dropping batch padding.
    return outT[:, :N].T


def init_pinn_params(key, in_dim, out_dim, layer_size, layer_count):
    """Deterministic init mimicking nn.Linear default: U(-1/sqrt(fan_in), 1/sqrt(fan_in))."""
    dims = [in_dim] + [layer_size] * (1 + layer_count) + [out_dim]
    params = []
    for fan_in, fan_out in zip(dims[:-1], dims[1:]):
        key, kw, kb = jax.random.split(key, 3)
        bound = 1.0 / jnp.sqrt(float(fan_in))
        w = jax.random.uniform(kw, (fan_in, fan_out), jnp.float32, -bound, bound)
        b = jax.random.uniform(kb, (fan_out,), jnp.float32, -bound, bound)
        params.append((w, b))
    return params


def pinn_forward_ref(x, params):
    """Pure-JAX reference (row-major, PyTorch-equivalent) for correctness checking."""
    h = x
    for j, (w, b) in enumerate(params):
        h = h @ w + b
        if j < len(params) - 1:
            h = jnp.maximum(h, 0.0)
    return h


if __name__ == "__main__":
    # Small shapes consistent with a PINN: coordinates in, field value out.
    in_dim, out_dim, layer_size, layer_count = 2, 1, 32, 2

    key = jax.random.PRNGKey(0)
    key, kp = jax.random.split(key)
    params = init_pinn_params(kp, in_dim, out_dim, layer_size, layer_count)

    # Small batch (single grid step).
    key, kx = jax.random.split(key)
    x_small = jax.random.normal(kx, (16, in_dim), dtype=jnp.float32)
    out_small = jax.block_until_ready(pinn_forward(x_small, params))
    ref_small = pinn_forward_ref(x_small, params)
    assert out_small.shape == (16, out_dim)
    assert jnp.allclose(out_small, ref_small, atol=1e-5, rtol=1e-5), \
        "Pallas output mismatch vs reference (small batch)"

    # Non-multiple-of-128 batch: exercises padding and a >= 2-step parallel grid.
    key, kx2 = jax.random.split(key)
    x_big = jax.random.normal(kx2, (300, in_dim), dtype=jnp.float32)
    out_big = jax.block_until_ready(pinn_forward(x_big, params))
    ref_big = pinn_forward_ref(x_big, params)
    assert out_big.shape == (300, out_dim)
    assert jnp.allclose(out_big, ref_big, atol=1e-5, rtol=1e-5), \
        "Pallas output mismatch vs reference (padded batch)"

    # Optional bf16-MXU path (flag only; f32 stays the default for PINN accuracy).
    out_bf16 = jax.block_until_ready(pinn_forward(x_big, params, use_bf16=True))
    assert out_bf16.shape == (300, out_dim)
    assert jnp.allclose(out_bf16, ref_big, atol=1e-1, rtol=1e-1), \
        "Pallas bf16 output too far from reference"

    print("KERNEL_OK")
</pallas_src>

<mosaic_0001>
module attributes {stable_mosaic.version = 11 : i64} {
  func.func @kernel(%arg0: i32, %arg1: memref<2x128xf32, #tpu.memory_space<vmem>>, %arg2: memref<32x2xf32, #tpu.memory_space<vmem>>, %arg3: memref<32x1xf32, #tpu.memory_space<vmem>>, %arg4: memref<2x32x32xf32, #tpu.memory_space<vmem>>, %arg5: memref<2x32x1xf32, #tpu.memory_space<vmem>>, %arg6: memref<1x32xf32, #tpu.memory_space<vmem>>, %arg7: memref<1x1xf32, #tpu.memory_space<vmem>>, %arg8: memref<1x128xf32, #tpu.memory_space<vmem>>) attributes {dimension_semantics = [#tpu.dimension_semantics<parallel>], iteration_bounds = array<i64: 1>, scalar_prefetch = 0 : i64, scratch_operands = 0 : i64, tpu.core_type = #tpu.core_type<tc>, window_params = [{transform_indices = @transform_0, window_bounds = array<i64: 2, 128>}, {pipeline_mode = #tpu.pipeline_mode<synchronous>, transform_indices = @transform_1, window_bounds = array<i64: 32, 2>}, {pipeline_mode = #tpu.pipeline_mode<synchronous>, transform_indices = @transform_2, window_bounds = array<i64: 32, 1>}, {pipeline_mode = #tpu.pipeline_mode<synchronous>, transform_indices = @transform_3, window_bounds = array<i64: 2, 32, 32>}, {pipeline_mode = #tpu.pipeline_mode<synchronous>, transform_indices = @transform_4, window_bounds = array<i64: 2, 32, 1>}, {pipeline_mode = #tpu.pipeline_mode<synchronous>, transform_indices = @transform_5, window_bounds = array<i64: 1, 32>}, {pipeline_mode = #tpu.pipeline_mode<synchronous>, transform_indices = @transform_6, window_bounds = array<i64: 1, 1>}, {transform_indices = @transform_7, window_bounds = array<i64: 1, 128>}]} {
    %c0 = arith.constant 0 : index
    %c0_0 = arith.constant 0 : index
    %0 = vector.load %arg1[%c0, %c0_0] : memref<2x128xf32, #tpu.memory_space<vmem>>, vector<2x128xf32>
    %c0_1 = arith.constant 0 : index
    %c0_2 = arith.constant 0 : index
    %1 = vector.load %arg2[%c0_1, %c0_2] : memref<32x2xf32, #tpu.memory_space<vmem>>, vector<32x2xf32>
    %c0_3 = arith.constant 0 : index
    %c0_4 = arith.constant 0 : index
    %2 = vector.load %arg3[%c0_3, %c0_4] : memref<32x1xf32, #tpu.memory_space<vmem>>, vector<32x1xf32>
    %3 = vector.extract_strided_slice %1 {offsets = [0, 0], sizes = [32, 1], strides = [1, 1]} : vector<32x2xf32> to vector<32x1xf32>
    %4 = vector.extract_strided_slice %0 {offsets = [0, 0], sizes = [1, 128], strides = [1, 1]} : vector<2x128xf32> to vector<1x128xf32>
    %5 = vector.broadcast %3 : vector<32x1xf32> to vector<32x128xf32>
    %6 = vector.broadcast %4 : vector<1x128xf32> to vector<32x128xf32>
    %7 = arith.mulf %5, %6 : vector<32x128xf32>
    %8 = vector.broadcast %2 : vector<32x1xf32> to vector<32x128xf32>
    %9 = arith.addf %8, %7 : vector<32x128xf32>
    %10 = vector.extract_strided_slice %1 {offsets = [0, 1], sizes = [32, 1], strides = [1, 1]} : vector<32x2xf32> to vector<32x1xf32>
    %11 = vector.extract_strided_slice %0 {offsets = [1, 0], sizes = [1, 128], strides = [1, 1]} : vector<2x128xf32> to vector<1x128xf32>
    %12 = vector.broadcast %10 : vector<32x1xf32> to vector<32x128xf32>
    %13 = vector.broadcast %11 : vector<1x128xf32> to vector<32x128xf32>
    %14 = arith.mulf %12, %13 : vector<32x128xf32>
    %15 = arith.addf %9, %14 : vector<32x128xf32>
    %cst = arith.constant 0.000000e+00 : f32
    %16 = vector.broadcast %cst : f32 to vector<32x128xf32>
    %17 = arith.maximumf %15, %16 : vector<32x128xf32>
    %c0_5 = arith.constant 0 : index
    %c0_6 = arith.constant 0 : index
    %c0_7 = arith.constant 0 : index
    %18 = vector.load %arg4[%c0_5, %c0_6, %c0_7] : memref<2x32x32xf32, #tpu.memory_space<vmem>>, vector<1x32x32xf32>
    %19 = vector.shape_cast %18 : vector<1x32x32xf32> to vector<32x32xf32>
    %c0_8 = arith.constant 0 : index
    %c0_9 = arith.constant 0 : index
    %c0_10 = arith.constant 0 : index
    %20 = vector.load %arg5[%c0_8, %c0_9, %c0_10] : memref<2x32x1xf32, #tpu.memory_space<vmem>>, vector<1x32x1xf32>
    %21 = vector.shape_cast %20 : vector<1x32x1xf32> to vector<32x1xf32>
    %cst_11 = arith.constant dense<0.000000e+00> : vector<32x128xf32>
    %22 = tpu.matmul %19, %17, %cst_11 {dimension_numbers = #tpu.dot_dimension_numbers<[1], [0], [0], [1], [0, 0, 1, 1], [], []>} : vector<32x32xf32>, vector<32x128xf32>, vector<32x128xf32> -> vector<32x128xf32>
    %23 = vector.broadcast %21 : vector<32x1xf32> to vector<32x128xf32>
    %24 = arith.addf %22, %23 : vector<32x128xf32>
    %cst_12 = arith.constant 0.000000e+00 : f32
    %25 = vector.broadcast %cst_12 : f32 to vector<32x128xf32>
    %26 = arith.maximumf %24, %25 : vector<32x128xf32>
    %c1 = arith.constant 1 : index
    %c0_13 = arith.constant 0 : index
    %c0_14 = arith.constant 0 : index
    %27 = vector.load %arg4[%c1, %c0_13, %c0_14] : memref<2x32x32xf32, #tpu.memory_space<vmem>>, vector<1x32x32xf32>
    %28 = vector.shape_cast %27 : vector<1x32x32xf32> to vector<32x32xf32>
    %c1_15 = arith.constant 1 : index
    %c0_16 = arith.constant 0 : index
    %c0_17 = arith.constant 0 : index
    %29 = vector.load %arg5[%c1_15, %c0_16, %c0_17] : memref<2x32x1xf32, #tpu.memory_space<vmem>>, vector<1x32x1xf32>
    %30 = vector.shape_cast %29 : vector<1x32x1xf32> to vector<32x1xf32>
    %cst_18 = arith.constant dense<0.000000e+00> : vector<32x128xf32>
    %31 = tpu.matmul %28, %26, %cst_18 {dimension_numbers = #tpu.dot_dimension_numbers<[1], [0], [0], [1], [0, 0, 1, 1], [], []>} : vector<32x32xf32>, vector<32x128xf32>, vector<32x128xf32> -> vector<32x128xf32>
    %32 = vector.broadcast %30 : vector<32x1xf32> to vector<32x128xf32>
    %33 = arith.addf %31, %32 : vector<32x128xf32>
    %cst_19 = arith.constant 0.000000e+00 : f32
    %34 = vector.broadcast %cst_19 : f32 to vector<32x128xf32>
    %35 = arith.maximumf %33, %34 : vector<32x128xf32>
    %c0_20 = arith.constant 0 : index
    %c0_21 = arith.constant 0 : index
    %36 = vector.load %arg6[%c0_20, %c0_21] : memref<1x32xf32, #tpu.memory_space<vmem>>, vector<1x32xf32>
    %cst_22 = arith.constant dense<0.000000e+00> : vector<1x128xf32>
    %37 = tpu.matmul %36, %35, %cst_22 {dimension_numbers = #tpu.dot_dimension_numbers<[1], [0], [0], [1], [0, 0, 1, 1], [], []>} : vector<1x32xf32>, vector<32x128xf32>, vector<1x128xf32> -> vector<1x128xf32>
    %c0_23 = arith.constant 0 : index
    %c0_24 = arith.constant 0 : index
    %38 = vector.load %arg7[%c0_23, %c0_24] : memref<1x1xf32, #tpu.memory_space<vmem>>, vector<1x1xf32>
    %39 = vector.broadcast %38 : vector<1x1xf32> to vector<1x128xf32>
    %40 = arith.addf %37, %39 : vector<1x128xf32>
    %c0_25 = arith.constant 0 : index
    %c0_26 = arith.constant 0 : index
    %41 = vector.load %arg8[%c0_25, %c0_26] : memref<1x128xf32, #tpu.memory_space<vmem>>, vector<1x128xf32>
    tpu.vector_store %arg8[%c0_25, %c0_26], %40 {strides = array<i32>} : memref<1x128xf32, #tpu.memory_space<vmem>>, vector<1x128xf32>,
    return
  }
  func.func @transform_0(%arg0: i32) -> (i32, i32) {
    %c0_i32 = arith.constant 0 : i32
    %c0_i32_0 = arith.constant 0 : i32
    return %c0_i32, %arg0 : i32, i32
  }
  func.func @transform_1(%arg0: i32) -> (i32, i32) {
    %c0_i32 = arith.constant 0 : i32
    %c0_i32_0 = arith.constant 0 : i32
    %c0_i32_1 = arith.constant 0 : i32
    return %c0_i32, %c0_i32_0 : i32, i32
  }
  func.func @transform_2(%arg0: i32) -> (i32, i32) {
    %c0_i32 = arith.constant 0 : i32
    %c0_i32_0 = arith.constant 0 : i32
    %c0_i32_1 = arith.constant 0 : i32
    return %c0_i32, %c0_i32_0 : i32, i32
  }
  func.func @transform_3(%arg0: i32) -> (i32, i32, i32) {
    %c0_i32 = arith.constant 0 : i32
    %c0_i32_0 = arith.constant 0 : i32
    %c0_i32_1 = arith.constant 0 : i32
    %c0_i32_2 = arith.constant 0 : i32
    return %c0_i32, %c0_i32_0, %c0_i32_1 : i32, i32, i32
  }
  func.func @transform_4(%arg0: i32) -> (i32, i32, i32) {
    %c0_i32 = arith.constant 0 : i32
    %c0_i32_0 = arith.constant 0 : i32
    %c0_i32_1 = arith.constant 0 : i32
    %c0_i32_2 = arith.constant 0 : i32
    return %c0_i32, %c0_i32_0, %c0_i32_1 : i32, i32, i32
  }
  func.func @transform_5(%arg0: i32) -> (i32, i32) {
    %c0_i32 = arith.constant 0 : i32
    %c0_i32_0 = arith.constant 0 : i32
    %c0_i32_1 = arith.constant 0 : i32
    return %c0_i32, %c0_i32_0 : i32, i32
  }
  func.func @transform_6(%arg0: i32) -> (i32, i32) {
    %c0_i32 = arith.constant 0 : i32
    %c0_i32_0 = arith.constant 0 : i32
    %c0_i32_1 = arith.constant 0 : i32
    return %c0_i32, %c0_i32_0 : i32, i32
  }
  func.func @transform_7(%arg0: i32) -> (i32, i32) {
    %c0_i32 = arith.constant 0 : i32
    %c0_i32_0 = arith.constant 0 : i32
    return %c0_i32, %arg0 : i32, i32
  }
}

</mosaic_0001>

<llo_original>
// kernel: tpu_custom_call.1
$region0: #{tpu_custom_call.1}
  #allocation0 [shape = 'u32[]', space=smem, size = 0x4, offset = 0x4, fixed_abs, tag = 'smem constant byte address 0x4 - core index']
  #allocation1 [shape = 'u32[144,128]{1,0:T(1,128)}', space=vmem, size = 0x12000, scoped, tag = 'internal scratch']
  #allocation2 [shape = 'f32[1,1]{1,0:T(1,128)S(1)}', space=vmem, size = 0x200, scoped, tag = 'scoped memory for tpu_custom_call.1']
  %s0 = inlined_call_operand.vmem [shape: f32[2,128], index: 0, kind: input, shape index: {}]
  %s1 = inlined_call_operand.vmem [shape: f32[32,2], index: 1, kind: input, shape index: {}]
  %s2 = inlined_call_operand.vmem [shape: f32[32,1], index: 2, kind: input, shape index: {}]
  %s3 = inlined_call_operand.vmem [shape: f32[2,32,32], index: 3, kind: input, shape index: {}]
  %s4 = inlined_call_operand.vmem [shape: f32[2,32,1], index: 4, kind: input, shape index: {}]
  %s5 = inlined_call_operand.vmem [shape: f32[1,32], index: 5, kind: input, shape index: {}]
  %s6 = inlined_call_operand.<no memory space> [shape: f32[1,1], index: 6, kind: input, shape index: {}]
  %s7 = inlined_call_operand.hbm [shape: f32[1,128], index: 7, kind: output, shape index: {}]
  %s8 = sld [smem:[#allocation0]]
  $region38: #{tpu_custom_call.1} parent=0
    _
  %s10 = ssub.s32 1, %s8
  %s11 = scalar_select 0, %s10, %s8
  %v12 = vstv %s6
  %13 = vst [vmem:[#allocation2] sm:$0x1] %v12
  $region1: #{tpu_custom_call.1} parent=0
    #allocation3 [shape = 'u8[512]{0}', space=vmem, size = 0x400, scoped, tag = 'output window, operand 0, single buffered']
    #allocation4 [shape = 's32[1]{0}', space=sflag, size = 0x4, scoped, tag = 'scoped memory for tpu_custom_call.1']
    %14 = vsyncpa [#allocation4], 0
    // Predicated region
    $region2: #{tpu_custom_call.1} parent=1 // pred_check
      _
    $region3: #{tpu_custom_call.1} parent=1 // pred_check_branch
      %16 = sbr.rel (0) target = $region5
    $region4: #{tpu_custom_call.1} parent=1 // pred_region
      _
    $region5: #{tpu_custom_call.1} parent=1 // pred_fallthru
      _
    // Predicated region
    $region6: #{tpu_custom_call.1} parent=1 // pred_check
      _
    $region7: #{tpu_custom_call.1} parent=1 // pred_check_branch
      %18 = sbr.rel (0) target = $region9
    $region8: #{tpu_custom_call.1} parent=1 // pred_region
      _
    $region9: #{tpu_custom_call.1} parent=1 // pred_fallthru
      _
    // Predicated region
    $region10: #{tpu_custom_call.1} parent=1 // pred_check
      _
    $region11: #{tpu_custom_call.1} parent=1 // pred_check_branch
      %20 = sbr.rel (0) target = $region13
    $region12: #{tpu_custom_call.1} parent=1 // pred_region
      _
    $region13: #{tpu_custom_call.1} parent=1 // pred_fallthru
      _
    // Predicated region
    $region14: #{tpu_custom_call.1} parent=1 // pred_check
      _
    $region15: #{tpu_custom_call.1} parent=1 // pred_check_branch
      %22 = sbr.rel (0) target = $region17
    $region16: #{tpu_custom_call.1} parent=1 // pred_region
      _
    $region17: #{tpu_custom_call.1} parent=1 // pred_fallthru
      _
    // Predicated region
    $region18: #{tpu_custom_call.1} parent=1 // pred_check
      _
    $region19: #{tpu_custom_call.1} parent=1 // pred_check_branch
      %24 = sbr.rel (0) target = $region21
    $region20: #{tpu_custom_call.1} parent=1 // pred_region
      _
    $region21: #{tpu_custom_call.1} parent=1 // pred_fallthru
      _
    // Predicated region
    $region22: #{tpu_custom_call.1} parent=1 // pred_check
      _
    $region23: #{tpu_custom_call.1} parent=1 // pred_check_branch
      %26 = sbr.rel (0) target = $region25
    $region24: #{tpu_custom_call.1} parent=1 // pred_region
      _
    $region25: #{tpu_custom_call.1} parent=1 // pred_fallthru
      _
    // Predicated region
    $region26: #{tpu_custom_call.1} parent=1 // pred_check
      _
    $region27: #{tpu_custom_call.1} parent=1 // pred_check_branch
      %28 = sbr.rel (0) target = $region29
    $region28: #{tpu_custom_call.1} parent=1 // pred_region
      _
    $region29: #{tpu_custom_call.1} parent=1 // pred_fallthru
      _
    %v29 = vld [vmem:[%s0] sm:$0x3]
    %v30 = vld [vmem:[%s1] sm:$0xff]
    %v31 = vld [vmem:[%s1 + $0x8] sm:$0xff]
    %v32 = vld [vmem:[%s1 + $0x10] sm:$0xff]
    %v33 = vld [vmem:[%s1 + $0x18] sm:$0xff]
    %v34 = vld [vmem:[%s2] sm:$0xff]
    %v35 = vld [vmem:[%s2 + $0x8] sm:$0xff]
    %v36 = vld [vmem:[%s2 + $0x10] sm:$0xff]
    %v37 = vld [vmem:[%s2 + $0x18] sm:$0xff]
    %39 = vset.pattern.permute.xlu0 0
    %40 = vperm.xlu0 %39, %v30
    %v41 = vpop.permute.xlu0 %40
    %44 = vset.pattern.permute.xlu0 0
    %45 = vperm.xlu0 %44, %v31
    %v46 = vpop.permute.xlu0 %45
    %49 = vset.pattern.permute.xlu0 0
    %50 = vperm.xlu0 %49, %v32
    %v51 = vpop.permute.xlu0 %50
    %54 = vset.pattern.permute.xlu0 0
    %55 = vperm.xlu0 %54, %v33
    %v56 = vpop.permute.xlu0 %55
    %v58 = vlaneseq
    %v59 = vshrl.u32 %v58, 7
    %v60 = vsub.s32 0, %v59
    %v61 = vrot.slane %v29, %v60
    %v62 = vmul.f32 %v41, %v61
    %v63 = vmul.f32 %v46, %v61
    %v64 = vmul.f32 %v51, %v61
    %v65 = vmul.f32 %v56, %v61
    %67 = vset.pattern.permute.xlu0 0
    %68 = vperm.xlu0 %67, %v34
    %v69 = vpop.permute.xlu0 %68
    %72 = vset.pattern.permute.xlu0 0
    %73 = vperm.xlu0 %72, %v35
    %v74 = vpop.permute.xlu0 %73
    %77 = vset.pattern.permute.xlu0 0
    %78 = vperm.xlu0 %77, %v36
    %v79 = vpop.permute.xlu0 %78
    %82 = vset.pattern.permute.xlu0 0
    %83 = vperm.xlu0 %82, %v37
    %v84 = vpop.permute.xlu0 %83
    %v86 = vadd.f32 %v69, %v62
    %v87 = vadd.f32 %v74, %v63
    %v88 = vadd.f32 %v79, %v64
    %v89 = vadd.f32 %v84, %v65
    %90 = vset.pattern.permute.xlu0 1
    %91 = vperm.xlu0 %90, %v30
    %v92 = vpop.permute.xlu0 %91
    %94 = vset.pattern.permute.xlu0 1
    %95 = vperm.xlu0 %94, %v31
    %v96 = vpop.permute.xlu0 %95
    %98 = vset.pattern.permute.xlu0 1
    %99 = vperm.xlu0 %98, %v32
    %v100 = vpop.permute.xlu0 %99
    %102 = vset.pattern.permute.xlu0 1
    %103 = vperm.xlu0 %102, %v33
    %v104 = vpop.permute.xlu0 %103
    %v106 = vlaneseq
    %v107 = vshrl.u32 %v106, 7
    %v108 = vsub.s32 1, %v107
    %v109 = vrot.slane %v29, %v108
    %v110 = vmul.f32 %v92, %v109
    %v111 = vmul.f32 %v96, %v109
    %v112 = vmul.f32 %v100, %v109
    %v113 = vmul.f32 %v104, %v109
    %v114 = vadd.f32 %v86, %v110
    %v115 = vadd.f32 %v87, %v111
    %v116 = vadd.f32 %v88, %v112
    %v117 = vadd.f32 %v89, %v113
    %v118 = vmax.f32 %v114, 0.0
    %v119 = vmax.f32 %v115, 0.0
    %v120 = vmax.f32 %v116, 0.0
    %v121 = vmax.f32 %v117, 0.0
    %v122 = vld [vmem:[%s3] sm:$0xff]
    %v123 = vld [vmem:[%s3 + $0x8] sm:$0xff]
    %v124 = vld [vmem:[%s3 + $0x10] sm:$0xff]
    %v125 = vld [vmem:[%s3 + $0x18] sm:$0xff]
    %v126 = vld [vmem:[%s4] sm:$0xff]
    %v127 = vld [vmem:[%s4 + $0x8] sm:$0xff]
    %v128 = vld [vmem:[%s4 + $0x10] sm:$0xff]
    %v129 = vld [vmem:[%s4 + $0x18] sm:$0xff]
    %131 = vset.pattern.permute.xlu0 0
    %132 = vperm.xlu0 %131, %v126
    %v133 = vpop.permute.xlu0 %132
    %136 = vset.pattern.permute.xlu0 0
    %137 = vperm.xlu0 %136, %v127
    %v138 = vpop.permute.xlu0 %137
    %141 = vset.pattern.permute.xlu0 0
    %142 = vperm.xlu0 %141, %v128
    %v143 = vpop.permute.xlu0 %142
    %146 = vset.pattern.permute.xlu0 0
    %147 = vperm.xlu0 %146, %v129
    %v148 = vpop.permute.xlu0 %147
    %vm150 = vcmask 261120
    %v152 = vsel %vm150, %v122, 0
    %v155 = vsel %vm150, %v123, 0
    %v158 = vsel %vm150, %v124, 0
    %v161 = vsel %vm150, %v125, 0
    %163 = vmatprep.subr.mxu0 0.0
    %164 = vmatpush1.msra.mxu0 %v118
    %165 = vmatprep.subr.mxu0 0.0
    %166 = vmatpush1.msra.mxu0 %v119
    %167 = vmatprep.subr.mxu0 0.0
    %168 = vmatpush1.msra.mxu0 %v120
    %169 = vmatprep.subr.mxu0 0.0
    %170 = vmatpush1.msra.mxu0 %v121
    %171 = vmatprep.subr.mxu0 0.0
    %172 = vmatpush1.msra.mxu0 0.0
    %173 = vmatprep.subr.mxu0 0.0
    %174 = vmatpush1.msra.mxu0 0.0
    %175 = vmatprep.subr.mxu0 0.0
    %176 = vmatpush1.msra.mxu0 0.0
    %177 = vmatprep.subr.mxu0 0.0
    %178 = vmatpush1.msra.mxu0 0.0
    %179 = vmatprep.subr.mxu0 0.0
    %180 = vmatpush1.msra.mxu0 0.0
    %181 = vmatprep.subr.mxu0 0.0
    %182 = vmatpush1.msra.mxu0 0.0
    %183 = vmatprep.subr.mxu0 0.0
    %184 = vmatpush1.msra.mxu0 0.0
    %185 = vmatprep.subr.mxu0 0.0
    %186 = vmatpush1.msra.mxu0 0.0
    %187 = vmatprep.subr.mxu0 0.0
    %188 = vmatpush1.msra.mxu0 0.0
    %189 = vmatprep.subr.mxu0 0.0
    %190 = vmatpush1.msra.mxu0 0.0
    %191 = vmatprep.subr.mxu0 0.0
    %192 = vmatpush1.msra.mxu0 0.0
    %193 = vmatprep.subr.mxu0 0.0
    %194 = vmatpush1.msra.mxu0 0.0
    %195 = vmatprep.subr.mxu0 0.0
    %196 = vmatpush1.msra.mxu0 0.0
    %197 = vmatprep.subr.mxu0 0.0
    %198 = vmatpush1.msra.mxu0 0.0
    %199 = vmatprep.subr.mxu0 0.0
    %200 = vmatpush1.msra.mxu0 0.0
    %201 = vmatprep.subr.mxu0 0.0
    %202 = vmatpush1.msra.mxu0 0.0
    %203 = vmatprep.subr.mxu0 0.0
    %204 = vmatpush1.msra.mxu0 0.0
    %205 = vmatprep.subr.mxu0 0.0
    %206 = vmatpush1.msra.mxu0 0.0
    %207 = vmatprep.subr.mxu0 0.0
    %208 = vmatpush1.msra.mxu0 0.0
    %209 = vmatprep.subr.mxu0 0.0
    %210 = vmatpush1.msra.mxu0 0.0
    %211 = vmatprep.subr.mxu0 0.0
    %212 = vmatpush1.msra.mxu0 0.0
    %213 = vmatprep.subr.mxu0 0.0
    %214 = vmatpush1.msra.mxu0 0.0
    %215 = vmatprep.subr.mxu0 0.0
    %216 = vmatpush1.msra.mxu0 0.0
    %217 = vmatprep.subr.mxu0 0.0
    %218 = vmatpush1.msra.mxu0 0.0
    %219 = vmatprep.subr.mxu0 0.0
    %220 = vmatpush1.msra.mxu0 0.0
    %221 = vmatprep.subr.mxu0 0.0
    %222 = vmatpush1.msra.mxu0 0.0
    %223 = vmatprep.subr.mxu0 0.0
    %224 = vmatpush1.msra.mxu0 0.0
    %225 = vmatprep.subr.mxu0 0.0
    %226 = vmatpush1.msra.mxu0 0.0
    %227 = vmatprep.mubr.f32.mxu0 0.0
    %228 = vmatmul.mubr.f32.gmra.mrb[0].mxu0 %v152
    %v229 = vpop.f32.mrb[0].mxu0
    %v230 = vadd.f32 %v133, %v229
    %v231 = vpop.f32.mrb[0].mxu0
    %232 = vmatprep.mubr.f32.mxu0 0.0
    %233 = vmatmul.mubr.f32.gmra.mrb[0].mxu0 %v155
    %v234 = vpop.f32.mrb[0].mxu0
    %v235 = vadd.f32 %v138, %v234
    %v236 = vpop.f32.mrb[0].mxu0
    %237 = vmatprep.mubr.f32.mxu0 0.0
    %238 = vmatmul.mubr.f32.gmra.mrb[0].mxu0 %v158
    %v239 = vpop.f32.mrb[0].mxu0
    %v240 = vadd.f32 %v143, %v239
    %v241 = vpop.f32.mrb[0].mxu0
    %242 = vmatprep.mubr.f32.mxu0 0.0
    %243 = vmatmul.mubr.f32.gmra.mrb[0].mxu0 %v161
    %v244 = vpop.f32.mrb[0].mxu0
    %v245 = vadd.f32 %v148, %v244
    %v246 = vpop.f32.mrb[0].mxu0
    %247 = vdwg.mxu0
    %v248 = vmax.f32 %v230, 0.0
    %v249 = vmax.f32 %v235, 0.0
    %v250 = vmax.f32 %v240, 0.0
    %v251 = vmax.f32 %v245, 0.0
    %s252 = scalar_lea.vmem %s3, 32
    %v253 = vld [vmem:[%s252] sm:$0xff]
    %v254 = vld [vmem:[%s252 + $0x8] sm:$0xff]
    %v255 = vld [vmem:[%s252 + $0x10] sm:$0xff]
    %v256 = vld [vmem:[%s252 + $0x18] sm:$0xff]
    %s257 = scalar_lea.vmem %s4, 32
    %v258 = vld [vmem:[%s257] sm:$0xff]
    %v259 = vld [vmem:[%s257 + $0x8] sm:$0xff]
    %v260 = vld [vmem:[%s257 + $0x10] sm:$0xff]
    %v261 = vld [vmem:[%s257 + $0x18] sm:$0xff]
    %263 = vset.pattern.permute.xlu0 0
    %264 = vperm.xlu0 %263, %v258
    %v265 = vpop.permute.xlu0 %264
    %268 = vset.pattern.permute.xlu0 0
    %269 = vperm.xlu0 %268, %v259
    %v270 = vpop.permute.xlu0 %269
    %273 = vset.pattern.permute.xlu0 0
    %274 = vperm.xlu0 %273, %v260
    %v275 = vpop.permute.xlu0 %274
    %278 = vset.pattern.permute.xlu0 0
    %279 = vperm.xlu0 %278, %v261
    %v280 = vpop.permute.xlu0 %279
    %v283 = vsel %vm150, %v253, 0
    %v286 = vsel %vm150, %v254, 0
    %v289 = vsel %vm150, %v255, 0
    %v292 = vsel %vm150, %v256, 0
    %294 = vmatprep.subr.mxu0 0.0
    %295 = vmatpush1.msra.mxu0 %v248
    %296 = vmatprep.subr.mxu0 0.0
    %297 = vmatpush1.msra.mxu0 %v249
    %298 = vmatprep.subr.mxu0 0.0
    %299 = vmatpush1.msra.mxu0 %v250
    %300 = vmatprep.subr.mxu0 0.0
    %301 = vmatpush1.msra.mxu0 %v251
    %302 = vmatprep.subr.mxu0 0.0
    %303 = vmatpush1.msra.mxu0 0.0
    %304 = vmatprep.subr.mxu0 0.0
    %305 = vmatpush1.msra.mxu0 0.0
    %306 = vmatprep.subr.mxu0 0.0
    %307 = vmatpush1.msra.mxu0 0.0
    %308 = vmatprep.subr.mxu0 0.0
    %309 = vmatpush1.msra.mxu0 0.0
    %310 = vmatprep.subr.mxu0 0.0
    %311 = vmatpush1.msra.mxu0 0.0
    %312 = vmatprep.subr.mxu0 0.0
    %313 = vmatpush1.msra.mxu0 0.0
    %314 = vmatprep.subr.mxu0 0.0
    %315 = vmatpush1.msra.mxu0 0.0
    %316 = vmatprep.subr.mxu0 0.0
    %317 = vmatpush1.msra.mxu0 0.0
    %318 = vmatprep.subr.mxu0 0.0
    %319 = vmatpush1.msra.mxu0 0.0
    %320 = vmatprep.subr.mxu0 0.0
    %321 = vmatpush1.msra.mxu0 0.0
    %322 = vmatprep.subr.mxu0 0.0
    %323 = vmatpush1.msra.mxu0 0.0
    %324 = vmatprep.subr.mxu0 0.0
    %325 = vmatpush1.msra.mxu0 0.0
    %326 = vmatprep.subr.mxu0 0.0
    %327 = vmatpush1.msra.mxu0 0.0
    %328 = vmatprep.subr.mxu0 0.0
    %329 = vmatpush1.msra.mxu0 0.0
    %330 = vmatprep.subr.mxu0 0.0
    %331 = vmatpush1.msra.mxu0 0.0
    %332 = vmatprep.subr.mxu0 0.0
    %333 = vmatpush1.msra.mxu0 0.0
    %334 = vmatprep.subr.mxu0 0.0
    %335 = vmatpush1.msra.mxu0 0.0
    %336 = vmatprep.subr.mxu0 0.0
    %337 = vmatpush1.msra.mxu0 0.0
    %338 = vmatprep.subr.mxu0 0.0
    %339 = vmatpush1.msra.mxu0 0.0
    %340 = vmatprep.subr.mxu0 0.0
    %341 = vmatpush1.msra.mxu0 0.0
    %342 = vmatprep.subr.mxu0 0.0
    %343 = vmatpush1.msra.mxu0 0.0
    %344 = vmatprep.subr.mxu0 0.0
    %345 = vmatpush1.msra.mxu0 0.0
    %346 = vmatprep.subr.mxu0 0.0
    %347 = vmatpush1.msra.mxu0 0.0
    %348 = vmatprep.subr.mxu0 0.0
    %349 = vmatpush1.msra.mxu0 0.0
    %350 = vmatprep.subr.mxu0 0.0
    %351 = vmatpush1.msra.mxu0 0.0
    %352 = vmatprep.subr.mxu0 0.0
    %353 = vmatpush1.msra.mxu0 0.0
    %354 = vmatprep.subr.mxu0 0.0
    %355 = vmatpush1.msra.mxu0 0.0
    %356 = vmatprep.subr.mxu0 0.0
    %357 = vmatpush1.msra.mxu0 0.0
    %358 = vmatprep.mubr.f32.mxu0 0.0
    %359 = vmatmul.mubr.f32.gmra.mrb[0].mxu0 %v283
    %v360 = vpop.f32.mrb[0].mxu0
    %v361 = vadd.f32 %v265, %v360
    %v362 = vpop.f32.mrb[0].mxu0
    %363 = vmatprep.mubr.f32.mxu0 0.0
    %364 = vmatmul.mubr.f32.gmra.mrb[0].mxu0 %v286
    %v365 = vpop.f32.mrb[0].mxu0
    %v366 = vadd.f32 %v270, %v365
    %v367 = vpop.f32.mrb[0].mxu0
    %368 = vmatprep.mubr.f32.mxu0 0.0
    %369 = vmatmul.mubr.f32.gmra.mrb[0].mxu0 %v289
    %v370 = vpop.f32.mrb[0].mxu0
    %v371 = vadd.f32 %v275, %v370
    %v372 = vpop.f32.mrb[0].mxu0
    %373 = vmatprep.mubr.f32.mxu0 0.0
    %374 = vmatmul.mubr.f32.gmra.mrb[0].mxu0 %v292
    %v375 = vpop.f32.mrb[0].mxu0
    %v376 = vadd.f32 %v280, %v375
    %v377 = vpop.f32.mrb[0].mxu0
    %378 = vdwg.mxu0
    %v379 = vmax.f32 %v361, 0.0
    %v380 = vmax.f32 %v366, 0.0
    %v381 = vmax.f32 %v371, 0.0
    %v382 = vmax.f32 %v376, 0.0
    %v383 = vld [vmem:[%s5] sm:$0x1]
    %v384 = vld [vmem:[#allocation2] sm:$0x1]
    %386 = vset.pattern.permute.xlu0 0
    %387 = vperm.xlu0 %386, %v384
    %v388 = vpop.permute.xlu0 %387
    %v390 = vlaneseq
    %v391 = vshrl.u32 %v390, 7
    %v392 = vsub.s32 0, %v391
    %v393 = vrot.slane %v388, %v392
    %v395 = vsel %vm150, %v383, 0
    %397 = vmatprep.subr.mxu0 0.0
    %398 = vmatpush1.msra.mxu0 %v379
    %399 = vmatprep.subr.mxu0 0.0
    %400 = vmatpush1.msra.mxu0 %v380
    %401 = vmatprep.subr.mxu0 0.0
    %402 = vmatpush1.msra.mxu0 %v381
    %403 = vmatprep.subr.mxu0 0.0
    %404 = vmatpush1.msra.mxu0 %v382
    %405 = vmatprep.subr.mxu0 0.0
    %406 = vmatpush1.msra.mxu0 0.0
    %407 = vmatprep.subr.mxu0 0.0
    %408 = vmatpush1.msra.mxu0 0.0
    %409 = vmatprep.subr.mxu0 0.0
    %410 = vmatpush1.msra.mxu0 0.0
    %411 = vmatprep.subr.mxu0 0.0
    %412 = vmatpush1.msra.mxu0 0.0
    %413 = vmatprep.subr.mxu0 0.0
    %414 = vmatpush1.msra.mxu0 0.0
    %415 = vmatprep.subr.mxu0 0.0
    %416 = vmatpush1.msra.mxu0 0.0
    %417 = vmatprep.subr.mxu0 0.0
    %418 = vmatpush1.msra.mxu0 0.0
    %419 = vmatprep.subr.mxu0 0.0
    %420 = vmatpush1.msra.mxu0 0.0
    %421 = vmatprep.subr.mxu0 0.0
    %422 = vmatpush1.msra.mxu0 0.0
    %423 = vmatprep.subr.mxu0 0.0
    %424 = vmatpush1.msra.mxu0 0.0
    %425 = vmatprep.subr.mxu0 0.0
    %426 = vmatpush1.msra.mxu0 0.0
    %427 = vmatprep.subr.mxu0 0.0
    %428 = vmatpush1.msra.mxu0 0.0
    %429 = vmatprep.subr.mxu0 0.0
    %430 = vmatpush1.msra.mxu0 0.0
    %431 = vmatprep.subr.mxu0 0.0
    %432 = vmatpush1.msra.mxu0 0.0
    %433 = vmatprep.subr.mxu0 0.0
    %434 = vmatpush1.msra.mxu0 0.0
    %435 = vmatprep.subr.mxu0 0.0
    %436 = vmatpush1.msra.mxu0 0.0
    %437 = vmatprep.subr.mxu0 0.0
    %438 = vmatpush1.msra.mxu0 0.0
    %439 = vmatprep.subr.mxu0 0.0
    %440 = vmatpush1.msra.mxu0 0.0
    %441 = vmatprep.subr.mxu0 0.0
    %442 = vmatpush1.msra.mxu0 0.0
    %443 = vmatprep.subr.mxu0 0.0
    %444 = vmatpush1.msra.mxu0 0.0
    %445 = vmatprep.subr.mxu0 0.0
    %446 = vmatpush1.msra.mxu0 0.0
    %447 = vmatprep.subr.mxu0 0.0
    %448 = vmatpush1.msra.mxu0 0.0
    %449 = vmatprep.subr.mxu0 0.0
    %450 = vmatpush1.msra.mxu0 0.0
    %451 = vmatprep.subr.mxu0 0.0
    %452 = vmatpush1.msra.mxu0 0.0
    %453 = vmatprep.subr.mxu0 0.0
    %454 = vmatpush1.msra.mxu0 0.0
    %455 = vmatprep.subr.mxu0 0.0
    %456 = vmatpush1.msra.mxu0 0.0
    %457 = vmatprep.subr.mxu0 0.0
    %458 = vmatpush1.msra.mxu0 0.0
    %459 = vmatprep.subr.mxu0 0.0
    %460 = vmatpush1.msra.mxu0 0.0
    %461 = vmatprep.mubr.f32.mxu0 0.0
    %462 = vmatmul.mubr.f32.gmra.mrb[0].mxu0 %v395
    %v463 = vpop.f32.mrb[0].mxu0
    %v464 = vadd.f32 %v393, %v463
    %v465 = vpop.f32.mrb[0].mxu0
    %466 = vdwg.mxu0
    %467 = vst [vmem:[#allocation3] sm:$0x1] %v464
    // Predicated region
    $region30: #{tpu_custom_call.1} parent=1 // pred_check
      _
    $region31: #{tpu_custom_call.1} parent=1 // pred_check_branch
      %469 = sbr.rel (0) target = $region33
    $region32: #{tpu_custom_call.1} parent=1 // pred_region
      %s471 = ssub.s32 16, 16
      %472 = vsyncadd [#allocation4], %s471
      %s474 = sshll.u32 [#allocation3], 4
      %s475 = int_to_ptr.vmem [resolvable:$true] %s474
      %477 = dma.vmem_to_hbm [thread:$0]  %s475, 16, %s7, [#allocation4]
    $region33: #{tpu_custom_call.1} parent=1 // pred_fallthru
      _
    // Predicated region
    $region34: #{tpu_custom_call.1} parent=1 // pred_check
      _
    $region35: #{tpu_custom_call.1} parent=1 // pred_check_branch
      %479 = sbr.rel (0) target = $region37
    $region36: #{tpu_custom_call.1} parent=1 // pred_region
      %480 = dma.done [#allocation4], 16
    $region37: #{tpu_custom_call.1} parent=1 // pred_fallthru
      _
    %481 = vsyncpa [#allocation4], 1

</llo_original>
